<compile_context>
chip_gen: v7x
topology: tpu7x:2x2x1
jax: 0.10.0
libtpu: 0.0.40
codegen_flags: <defaults>
</compile_context>

<pallas_src>
import functools

import jax
import jax.numpy as jnp
from jax import lax
from jax.experimental import pallas as pl
from jax.experimental.pallas import tpu as pltpu

_LANES = 128
_SUBLANES = 8
_CHUNK_ROWS = 64     # multiple of the packed sublane tile for f32/bf16/int8
_EPS = 1e-3          # CharbonnierLoss default eps


def _round_up(a, b):
    return ((a + b - 1) // b) * b


def _block_partial_sum(x_ref, y_ref, eps2, chunk_rows, num_chunks, mask_info):
    """Reduce one (blk, 128) block to a (8, 128) f32 partial sum.

    Chunked accumulator loop: each iteration loads a (chunk_rows, 128) slice of
    x and y (native dtype), upcasts to f32, computes sqrt((x-y)^2 + eps^2),
    optionally masks the ragged tail, and adds into a persistent (8, 128)
    accumulator kept in vregs.  Nothing block-sized is ever materialized.
    """
    if mask_info is not None:
        base_row, n_rows, last_lanes = mask_info
        # Hoisted, loop-invariant index planes (row / lane within a chunk).
        row_io = lax.broadcasted_iota(jnp.int32, (chunk_rows, _LANES), 0)
        col_io = lax.broadcasted_iota(jnp.int32, (chunk_rows, _LANES), 1)

    def chunk_sum(c, acc):
        if isinstance(c, int):
            r0 = c * chunk_rows
        else:
            r0 = pl.multiple_of(c * chunk_rows, chunk_rows)
        xv = x_ref[pl.ds(r0, chunk_rows), :].astype(jnp.float32)
        yv = y_ref[pl.ds(r0, chunk_rows), :].astype(jnp.float32)
        d = xv - yv
        v = jnp.sqrt(d * d + eps2)
        if mask_info is not None:
            # Global (128-wide) row index of every element in this chunk.
            grow = base_row + r0 + row_io
            valid = (grow < n_rows - 1) | ((grow == n_rows - 1) & (col_io < last_lanes))
            # jnp.where (select) so garbage/NaN in the unread tail cannot leak.
            v = jnp.where(valid, v, 0.0)
        # (chunk_rows,128) -> (chunk_rows/8, 8, 128) sum over the leading axis:
        # pure vreg-wise adds, no cross-lane work.
        return acc + v.reshape(chunk_rows // _SUBLANES, _SUBLANES, _LANES).sum(axis=0)

    acc0 = jnp.zeros((_SUBLANES, _LANES), jnp.float32)
    if num_chunks == 1:
        return chunk_sum(0, acc0)
    return lax.fori_loop(0, num_chunks, chunk_sum, acc0,
                         unroll=min(4, num_chunks))


def _charbonnier_kernel(x_ref, y_ref, out_ref, *, eps2, blk, chunk_rows,
                        num_chunks, n_rows, last_lanes, num_blocks):
    # All tail information is static (shapes are static in JAX), so no scalar
    # prefetch is required; only the last grid block can contain invalid
    # elements and only it pays for the masking.
    no_tail = (num_blocks * blk == n_rows) and (last_lanes == _LANES)
    mask_info = ((num_blocks - 1) * blk, n_rows, last_lanes)

    if no_tail:
        out_ref[...] = _block_partial_sum(x_ref, y_ref, eps2, chunk_rows,
                                          num_chunks, None)
    elif num_blocks == 1:
        out_ref[...] = _block_partial_sum(x_ref, y_ref, eps2, chunk_rows,
                                          num_chunks, mask_info)
    else:
        is_last = pl.program_id(0) == num_blocks - 1

        @pl.when(jnp.logical_not(is_last))
        def _():
            out_ref[...] = _block_partial_sum(x_ref, y_ref, eps2, chunk_rows,
                                              num_chunks, None)

        @pl.when(is_last)
        def _():
            out_ref[...] = _block_partial_sum(x_ref, y_ref, eps2, chunk_rows,
                                              num_chunks, mask_info)


def charbonnier_loss(x, y, eps=_EPS, block_rows=4096):
    """Charbonnier loss: mean(sqrt((x-y)^2 + eps^2)).  Works for any shape."""
    assert x.shape == y.shape, "x and y must have the same shape"
    n = int(x.size)
    assert n > 0, "empty input"
    eps2 = float(eps) * float(eps)

    rows = -(-n // _LANES)            # ceil(n / 128)
    pad = rows * _LANES - n           # < 128 elements; only when n % 128 != 0

    xf = x.reshape(-1)
    yf = y.reshape(-1)
    if pad:
        # Minimal (< 128 element) pad so the flat array reshapes to
        # (rows, 128).  Padded elements are masked to zero in-kernel, so no
        # post-hoc eps correction is needed.
        xf = jnp.pad(xf, (0, pad))
        yf = jnp.pad(yf, (0, pad))
    xf = xf.reshape(rows, _LANES)
    yf = yf.reshape(rows, _LANES)

    # Block sizing: multiple of 64 rows (covers f32/bf16/int8 sublane packing).
    blk = max(_CHUNK_ROWS, _round_up(int(block_rows), _CHUNK_ROWS))
    # v7x megacore: if a sizeable input would collapse into one grid block,
    # split it so the "parallel" grid axis has >= 2 steps.
    if 8 * _CHUNK_ROWS <= rows <= blk:
        blk = _round_up(-(-rows // 2), _CHUNK_ROWS)
    blk = min(blk, _round_up(rows, _CHUNK_ROWS))
    num_blocks = -(-rows // blk)
    num_chunks = blk // _CHUNK_ROWS
    last_lanes = n - (rows - 1) * _LANES      # valid lanes in the final row

    kernel = functools.partial(
        _charbonnier_kernel,
        eps2=eps2, blk=blk, chunk_rows=_CHUNK_ROWS, num_chunks=num_chunks,
        n_rows=rows, last_lanes=last_lanes, num_blocks=num_blocks)

    bytes_in = n * (jnp.dtype(x.dtype).itemsize + jnp.dtype(y.dtype).itemsize)
    cost = pl.CostEstimate(
        flops=5 * n,
        transcendentals=n,
        bytes_accessed=bytes_in + num_blocks * _SUBLANES * _LANES * 4)

    partials = pl.pallas_call(
        kernel,
        out_shape=jax.ShapeDtypeStruct((num_blocks * _SUBLANES, _LANES), jnp.float32),
        grid_spec=pltpu.PrefetchScalarGridSpec(
            num_scalar_prefetch=0,
            grid=(num_blocks,),
            in_specs=[
                pl.BlockSpec((blk, _LANES), lambda i: (i, 0)),
                pl.BlockSpec((blk, _LANES), lambda i: (i, 0)),
            ],
            out_specs=pl.BlockSpec((_SUBLANES, _LANES), lambda i: (i, 0)),
        ),
        compiler_params=pltpu.CompilerParams(
            dimension_semantics=("parallel",),
        ),
        cost_estimate=cost,
    )(xf, yf)

    # Tiny (num_blocks*8, 128) partials array: finish the reduction in XLA.
    return jnp.sum(partials, dtype=jnp.float32) / jnp.float32(n)


def _reference_charbonnier(x, y, eps=_EPS):
    d = (x - y).astype(jnp.float32)
    return jnp.mean(jnp.sqrt(d * d + jnp.float32(eps) * jnp.float32(eps)))


if __name__ == "__main__":
    key = jax.random.PRNGKey(0)
    kx, ky = jax.random.split(key)

    loss_fn = jax.jit(charbonnier_loss)

    # 1) Module-typical small image batch (n multiple of 128: no padding).
    N, C, H, W = 2, 4, 16, 16
    x = jax.random.normal(kx, (N, C, H, W), dtype=jnp.float32)
    y = jax.random.normal(ky, (N, C, H, W), dtype=jnp.float32)
    loss = loss_fn(x, y)
    jax.block_until_ready(loss)
    ref = _reference_charbonnier(x, y)
    if not jnp.allclose(loss, ref, rtol=1e-4, atol=1e-6):
        raise AssertionError(f"mismatch: pallas={loss} ref={ref}")

    # 2) Ragged element count (not a multiple of 128): exercises the in-kernel
    #    tail masking of the partial last row.
    x2 = jax.random.normal(kx, (2, 3, 10, 13), dtype=jnp.float32)
    y2 = jax.random.normal(ky, (2, 3, 10, 13), dtype=jnp.float32)
    loss2 = loss_fn(x2, y2)
    jax.block_until_ready(loss2)
    ref2 = _reference_charbonnier(x2, y2)
    if not jnp.allclose(loss2, ref2, rtol=1e-4, atol=1e-6):
        raise AssertionError(f"mismatch (ragged): pallas={loss2} ref={ref2}")

    # 3) Multi-block parallel grid with a partial last block: exercises the
    #    pl.when masked/unmasked split.
    x3 = jax.random.normal(kx, (2, 4, 65, 128), dtype=jnp.float32)
    y3 = jax.random.normal(ky, (2, 4, 65, 128), dtype=jnp.float32)
    loss3 = loss_fn(x3, y3)
    jax.block_until_ready(loss3)
    ref3 = _reference_charbonnier(x3, y3)
    if not jnp.allclose(loss3, ref3, rtol=1e-4, atol=1e-6):
        raise AssertionError(f"mismatch (multi-block): pallas={loss3} ref={ref3}")

    print("KERNEL_OK")
</pallas_src>

<mosaic_0001>
module attributes {stable_mosaic.version = 11 : i64} {
  func.func @_charbonnier_kernel(%arg0: i32, %arg1: memref<64x128xf32, #tpu.memory_space<vmem>>, %arg2: memref<64x128xf32, #tpu.memory_space<vmem>>, %arg3: memref<8x128xf32, #tpu.memory_space<vmem>>) attributes {dimension_semantics = [#tpu.dimension_semantics<parallel>], iteration_bounds = array<i64: 1>, scalar_prefetch = 0 : i64, scratch_operands = 0 : i64, tpu.core_type = #tpu.core_type<tc>, window_params = [{transform_indices = @transform_0, window_bounds = array<i64: 64, 128>}, {transform_indices = @transform_1, window_bounds = array<i64: 64, 128>}, {transform_indices = @transform_2, window_bounds = array<i64: 8, 128>}]} {
    %0 = tpu.iota {dimensions = array<i32: 0>} : vector<64x128xi32>
    %1 = tpu.iota {dimensions = array<i32: 1>} : vector<64x128xi32>
    %cst = arith.constant 0.000000e+00 : f32
    %2 = vector.broadcast %cst : f32 to vector<8x128xf32>
    %c0 = arith.constant 0 : index
    %c0_0 = arith.constant 0 : index
    %3 = vector.load %arg1[%c0, %c0_0] : memref<64x128xf32, #tpu.memory_space<vmem>>, vector<64x128xf32>
    %c0_1 = arith.constant 0 : index
    %c0_2 = arith.constant 0 : index
    %4 = vector.load %arg2[%c0_1, %c0_2] : memref<64x128xf32, #tpu.memory_space<vmem>>, vector<64x128xf32>
    %5 = arith.subf %3, %4 : vector<64x128xf32>
    %6 = arith.mulf %5, %5 : vector<64x128xf32>
    %cst_3 = arith.constant 9.99999997E-7 : f32
    %7 = vector.broadcast %cst_3 : f32 to vector<64x128xf32>
    %8 = arith.addf %6, %7 : vector<64x128xf32>
    %9 = math.sqrt %8 : vector<64x128xf32>
    %c0_i32 = arith.constant 0 : i32
    %10 = vector.broadcast %c0_i32 : i32 to vector<64x128xi32>
    %11 = arith.addi %10, %0 : vector<64x128xi32>
    %c15_i32 = arith.constant 15 : i32
    %12 = vector.broadcast %c15_i32 : i32 to vector<64x128xi32>
    %13 = arith.cmpi slt, %11, %12 : vector<64x128xi32>
    %c15_i32_4 = arith.constant 15 : i32
    %14 = vector.broadcast %c15_i32_4 : i32 to vector<64x128xi32>
    %15 = arith.cmpi eq, %11, %14 : vector<64x128xi32>
    %c128_i32 = arith.constant 128 : i32
    %16 = vector.broadcast %c128_i32 : i32 to vector<64x128xi32>
    %17 = arith.cmpi slt, %1, %16 : vector<64x128xi32>
    %18 = arith.andi %15, %17 : vector<64x128xi1>
    %19 = arith.ori %13, %18 : vector<64x128xi1>
    %cst_5 = arith.constant 0.000000e+00 : f32
    %20 = vector.broadcast %cst_5 : f32 to vector<64x128xf32>
    %21 = arith.select %19, %9, %20 : vector<64x128xi1>, vector<64x128xf32>
    %22 = vector.shape_cast %21 : vector<64x128xf32> to vector<8x8x128xf32>
    %cst_6 = arith.constant dense<0.000000e+00> : vector<8x128xf32>
    %23 = vector.multi_reduction <add>, %22, %cst_6 [0] : vector<8x8x128xf32> to vector<8x128xf32>
    %24 = arith.addf %2, %23 : vector<8x128xf32>
    %c0_7 = arith.constant 0 : index
    %c0_8 = arith.constant 0 : index
    %25 = vector.load %arg3[%c0_7, %c0_8] : memref<8x128xf32, #tpu.memory_space<vmem>>, vector<8x128xf32>
    tpu.vector_store %arg3[%c0_7, %c0_8], %24 {strides = array<i32>} : memref<8x128xf32, #tpu.memory_space<vmem>>, vector<8x128xf32>,
    return
  }
  func.func @transform_0(%arg0: i32) -> (i32, i32) {
    %c0_i32 = arith.constant 0 : i32
    %c0_i32_0 = arith.constant 0 : i32
    return %arg0, %c0_i32 : i32, i32
  }
  func.func @transform_1(%arg0: i32) -> (i32, i32) {
    %c0_i32 = arith.constant 0 : i32
    %c0_i32_0 = arith.constant 0 : i32
    return %arg0, %c0_i32 : i32, i32
  }
  func.func @transform_2(%arg0: i32) -> (i32, i32) {
    %c0_i32 = arith.constant 0 : i32
    %c0_i32_0 = arith.constant 0 : i32
    return %arg0, %c0_i32 : i32, i32
  }
}

</mosaic_0001>

<llo_original>
// kernel: charbonnier_loss.1
$region0: #{charbonnier_loss.1}
  #allocation0 [shape = 'u32[]', space=smem, size = 0x4, offset = 0x4, fixed_abs, tag = 'smem constant byte address 0x4 - core index']
  #allocation1 [shape = 'u32[144,128]{1,0:T(1,128)}', space=vmem, size = 0x12000, scoped, tag = 'internal scratch']
  %s0 = inlined_call_operand.vmem [shape: f32[16,128], index: 0, kind: input, shape index: {}]
  %s1 = inlined_call_operand.vmem [shape: f32[16,128], index: 1, kind: input, shape index: {}]
  %s2 = inlined_call_operand.vmem [shape: f32[8,128], index: 2, kind: output, shape index: {}]
  %s3 = sld [smem:[#allocation0]]
  $region18: #{charbonnier_loss.1} parent=0
    _
  %s5 = ssub.s32 1, %s3
  %s6 = scalar_select 0, %s5, %s3
  // Predicated region
  $region2: #{charbonnier_loss.1} parent=0 // pred_check
    _
  $region3: #{charbonnier_loss.1} parent=0 // pred_check_branch
    %8 = sbr.rel (0) target = $region5
  $region4: #{charbonnier_loss.1} parent=0 // pred_region
    _
  $region5: #{charbonnier_loss.1} parent=0 // pred_fallthru
    _
  // Predicated region
  $region6: #{charbonnier_loss.1} parent=0 // pred_check
    _
  $region7: #{charbonnier_loss.1} parent=0 // pred_check_branch
    %10 = sbr.rel (0) target = $region9
  $region8: #{charbonnier_loss.1} parent=0 // pred_region
    _
  $region9: #{charbonnier_loss.1} parent=0 // pred_fallthru
    _
  %v11 = vlaneseq
  %v12 = vshrl.u32 %v11, 7
  %v13 = vadd.s32 %v12, 8
  %v14 = vadd.s32 %v12, 16
  %v15 = vadd.s32 %v12, 24
  %v16 = vadd.s32 %v12, 32
  %v17 = vadd.s32 %v12, 40
  %v18 = vadd.s32 %v12, 48
  %v19 = vadd.s32 %v12, 56
  %v20 = vlaneseq
  %v21 = vand.u32 %v20, 127
  %v22 = vld [vmem:[%s0] sm:$0xff]
  %v23 = vld [vmem:[%s0 + $0x8] sm:$0xff]
  %v24 = vld [vmem:[%s0 + $0x10] sm:$0xff]
  %v25 = vld [vmem:[%s0 + $0x18] sm:$0xff]
  %v26 = vld [vmem:[%s0 + $0x20] sm:$0xff]
  %v27 = vld [vmem:[%s0 + $0x28] sm:$0xff]
  %v28 = vld [vmem:[%s0 + $0x30] sm:$0xff]
  %v29 = vld [vmem:[%s0 + $0x38] sm:$0xff]
  %v30 = vld [vmem:[%s1] sm:$0xff]
  %v31 = vld [vmem:[%s1 + $0x8] sm:$0xff]
  %v32 = vld [vmem:[%s1 + $0x10] sm:$0xff]
  %v33 = vld [vmem:[%s1 + $0x18] sm:$0xff]
  %v34 = vld [vmem:[%s1 + $0x20] sm:$0xff]
  %v35 = vld [vmem:[%s1 + $0x28] sm:$0xff]
  %v36 = vld [vmem:[%s1 + $0x30] sm:$0xff]
  %v37 = vld [vmem:[%s1 + $0x38] sm:$0xff]
  %v38 = vsub.f32 %v22, %v30
  %v39 = vsub.f32 %v23, %v31
  %v40 = vsub.f32 %v24, %v32
  %v41 = vsub.f32 %v25, %v33
  %v42 = vsub.f32 %v26, %v34
  %v43 = vsub.f32 %v27, %v35
  %v44 = vsub.f32 %v28, %v36
  %v45 = vsub.f32 %v29, %v37
  %v46 = vmul.f32 %v38, %v38
  %v47 = vmul.f32 %v39, %v39
  %v48 = vmul.f32 %v40, %v40
  %v49 = vmul.f32 %v41, %v41
  %v50 = vmul.f32 %v42, %v42
  %v51 = vmul.f32 %v43, %v43
  %v52 = vmul.f32 %v44, %v44
  %v53 = vmul.f32 %v45, %v45
  %v54 = vadd.f32 %v46, 1e-06
  %v55 = vadd.f32 %v47, 1e-06
  %v56 = vadd.f32 %v48, 1e-06
  %v57 = vadd.f32 %v49, 1e-06
  %v58 = vadd.f32 %v50, 1e-06
  %v59 = vadd.f32 %v51, 1e-06
  %v60 = vadd.f32 %v52, 1e-06
  %v61 = vadd.f32 %v53, 1e-06
  %v62 = vrsqrt.pop %v54
  %v63 = vmul.f32 %v54, %v62
  %vm64 = vcmp.eq.f32.partialorder %v54, inf
  %v65 = vsel %vm64, %v54, %v63
  %vm66 = vcmp.eq.f32.partialorder %v54, 0.0
  %v67 = vand.u32 %v54, 2147483648
  %v68 = vsel %vm66, %v67, %v65
  %v69 = vrsqrt.pop %v55
  %v70 = vmul.f32 %v55, %v69
  %vm71 = vcmp.eq.f32.partialorder %v55, inf
  %v72 = vsel %vm71, %v55, %v70
  %vm73 = vcmp.eq.f32.partialorder %v55, 0.0
  %v74 = vand.u32 %v55, 2147483648
  %v75 = vsel %vm73, %v74, %v72
  %v76 = vrsqrt.pop %v56
  %v77 = vmul.f32 %v56, %v76
  %vm78 = vcmp.eq.f32.partialorder %v56, inf
  %v79 = vsel %vm78, %v56, %v77
  %vm80 = vcmp.eq.f32.partialorder %v56, 0.0
  %v81 = vand.u32 %v56, 2147483648
  %v82 = vsel %vm80, %v81, %v79
  %v83 = vrsqrt.pop %v57
  %v84 = vmul.f32 %v57, %v83
  %vm85 = vcmp.eq.f32.partialorder %v57, inf
  %v86 = vsel %vm85, %v57, %v84
  %vm87 = vcmp.eq.f32.partialorder %v57, 0.0
  %v88 = vand.u32 %v57, 2147483648
  %v89 = vsel %vm87, %v88, %v86
  %v90 = vrsqrt.pop %v58
  %v91 = vmul.f32 %v58, %v90
  %vm92 = vcmp.eq.f32.partialorder %v58, inf
  %v93 = vsel %vm92, %v58, %v91
  %vm94 = vcmp.eq.f32.partialorder %v58, 0.0
  %v95 = vand.u32 %v58, 2147483648
  %v96 = vsel %vm94, %v95, %v93
  %v97 = vrsqrt.pop %v59
  %v98 = vmul.f32 %v59, %v97
  %vm99 = vcmp.eq.f32.partialorder %v59, inf
  %v100 = vsel %vm99, %v59, %v98
  %vm101 = vcmp.eq.f32.partialorder %v59, 0.0
  %v102 = vand.u32 %v59, 2147483648
  %v103 = vsel %vm101, %v102, %v100
  %v104 = vrsqrt.pop %v60
  %v105 = vmul.f32 %v60, %v104
  %vm106 = vcmp.eq.f32.partialorder %v60, inf
  %v107 = vsel %vm106, %v60, %v105
  %vm108 = vcmp.eq.f32.partialorder %v60, 0.0
  %v109 = vand.u32 %v60, 2147483648
  %v110 = vsel %vm108, %v109, %v107
  %v111 = vrsqrt.pop %v61
  %v112 = vmul.f32 %v61, %v111
  %vm113 = vcmp.eq.f32.partialorder %v61, inf
  %v114 = vsel %vm113, %v61, %v112
  %vm115 = vcmp.eq.f32.partialorder %v61, 0.0
  %v116 = vand.u32 %v61, 2147483648
  %v117 = vsel %vm115, %v116, %v114
  %vm118 = vcmp.lt.s32.totalorder %v12, 15
  %vm119 = vcmp.lt.s32.totalorder %v13, 15
  %vm120 = vcmp.lt.s32.totalorder %v14, 15
  %vm121 = vcmp.lt.s32.totalorder %v15, 15
  %vm122 = vcmp.lt.s32.totalorder %v16, 15
  %vm123 = vcmp.lt.s32.totalorder %v17, 15
  %vm124 = vcmp.lt.s32.totalorder %v18, 15
  %vm125 = vcmp.lt.s32.totalorder %v19, 15
  %vm126 = vcmp.eq.s32.totalorder %v12, 15
  %vm127 = vcmp.eq.s32.totalorder %v13, 15
  %vm128 = vcmp.eq.s32.totalorder %v14, 15
  %vm129 = vcmp.eq.s32.totalorder %v15, 15
  %vm130 = vcmp.eq.s32.totalorder %v16, 15
  %vm131 = vcmp.eq.s32.totalorder %v17, 15
  %vm132 = vcmp.eq.s32.totalorder %v18, 15
  %vm133 = vcmp.eq.s32.totalorder %v19, 15
  %vm134 = vcmp.lt.s32.totalorder %v21, 128
  %vm135 = vmand %vm126, %vm134
  %vm136 = vmand %vm127, %vm134
  %vm137 = vmand %vm128, %vm134
  %vm138 = vmand %vm129, %vm134
  %vm139 = vmand %vm130, %vm134
  %vm140 = vmand %vm131, %vm134
  %vm141 = vmand %vm132, %vm134
  %vm142 = vmand %vm133, %vm134
  %vm143 = vmor %vm118, %vm135
  %vm144 = vmor %vm119, %vm136
  %vm145 = vmor %vm120, %vm137
  %vm146 = vmor %vm121, %vm138
  %vm147 = vmor %vm122, %vm139
  %vm148 = vmor %vm123, %vm140
  %vm149 = vmor %vm124, %vm141
  %vm150 = vmor %vm125, %vm142
  %v151 = vsel %vm143, %v68, 0.0
  %v152 = vsel %vm144, %v75, 0.0
  %v153 = vsel %vm145, %v82, 0.0
  %v154 = vsel %vm146, %v89, 0.0
  %v155 = vsel %vm147, %v96, 0.0
  %v156 = vsel %vm148, %v103, 0.0
  %v157 = vsel %vm149, %v110, 0.0
  %v158 = vsel %vm150, %v117, 0.0
  %v159 = vadd.f32 %v151, %v152
  %v160 = vadd.f32 %v159, %v153
  %v161 = vadd.f32 %v160, %v154
  %v162 = vadd.f32 %v161, %v155
  %v163 = vadd.f32 %v162, %v156
  %v164 = vadd.f32 %v163, %v157
  %v165 = vadd.f32 %v164, %v158
  %v166 = vadd.f32 %v165, 0.0
  %167 = vst [vmem:[%s2] sm:$0xff] %v166
  // Predicated region
  $region10: #{charbonnier_loss.1} parent=0 // pred_check
    _
  $region11: #{charbonnier_loss.1} parent=0 // pred_check_branch
    %169 = sbr.rel (0) target = $region13
  $region12: #{charbonnier_loss.1} parent=0 // pred_region
    _
  $region13: #{charbonnier_loss.1} parent=0 // pred_fallthru
    _
  // Predicated region
  $region14: #{charbonnier_loss.1} parent=0 // pred_check
    _
  $region15: #{charbonnier_loss.1} parent=0 // pred_check_branch
    %171 = sbr.rel (0) target = $region17
  $region16: #{charbonnier_loss.1} parent=0 // pred_region
    _
  $region17: #{charbonnier_loss.1} parent=0 // pred_fallthru
    _

</llo_original>
